<compile_context>
chip_gen: v5e
topology: v5e:2x2
jax: 0.10.0
libtpu: 0.0.40
codegen_flags: <defaults>
</compile_context>

<pallas_src>
import functools

import jax
import jax.numpy as jnp
from jax import lax
from jax.experimental import pallas as pl
from jax.experimental.pallas import tpu as pltpu


def _catblock_kernel(x_ref, r1_ref, r2_ref, sc1_ref, sct1_ref, sc2_ref,
                     sct2_ref, pw_ref, g1_ref, b1_ref, g2_ref, b2_ref,
                     out_ref, pool_ref,
                     *, n, w, cin, ho, wo, hp, wp, ps, stride, eps):
    f32 = jnp.float32
    bf16 = jnp.bfloat16
    inv_m = 1.0 / float(n * ho * wo)        # elements per channel (both BNs)

    def batchnorm(c, sc_ref, sct_ref, g_ref, b_ref):
        # Training-mode batch stats; fused single pass (sum & sum-of-squares),
        # biased var = E[x^2] - mean^2.  Per-channel reduce and lane
        # re-broadcast via tiny 0/1 matmuls so the normalize stays lane-dense.
        s = jnp.sum(c, axis=0, keepdims=True)                     # (1, W*C)
        q = jnp.sum(c * c, axis=0, keepdims=True)                 # (1, W*C)
        ch = jnp.dot(jnp.concatenate([s, q], axis=0), sc_ref[...],
                     preferred_element_type=f32) * inv_m          # (2, C)
        mean = ch[0:1]
        var = ch[1:2] - mean * mean
        scale = g_ref[...] * lax.rsqrt(var + eps)                 # (1, C)
        shift = b_ref[...] - mean * scale
        sb = jnp.dot(jnp.concatenate([scale, shift], axis=0), sct_ref[...],
                     preferred_element_type=f32)                  # (2, W*C)
        return c * sb[0:1] + sb[1:2]

    # ---- conv1: 3 wide matmuls (K = w*cin).  Horizontal taps, stride and ----
    # ---- W-padding are folded into the block-structured weights r1[dy].  ----
    x = x_ref[...]                                   # (n, h+2, w*cin), H-padded
    c1 = jnp.zeros((n * ho, wo * cin), f32)
    for dy in range(3):
        if stride == 1:
            slab = x[:, dy:dy + ho, :]
        else:
            # strided sublane slice (no reshape/copy per tap)
            slab = lax.slice(x, (0, dy, 0),
                             (n, dy + (ho - 1) * stride + 1, w * cin),
                             (1, stride, 1))
        c1 = c1 + jnp.dot(slab.reshape(n * ho, w * cin).astype(bf16),
                          r1_ref[dy], preferred_element_type=f32)

    bn1 = batchnorm(c1, sc1_ref, sct1_ref, g1_ref, b1_ref)        # (n*ho, wo*cin)

    # ---- avg_pool2d(bn1, ps) BEFORE ReLU -- VALID windows (crop to hp*ps) ----
    pooled_w = jnp.dot(bn1, pw_ref[...], preferred_element_type=f32)  # (n*ho, wp*cin)
    pooled_w = pooled_w.reshape(n, ho, wp * cin)[:, :hp * ps, :]
    pool_ref[...] = (jnp.sum(pooled_w.reshape(n, hp, ps, wp * cin), axis=2)
                     * (1.0 / float(ps * ps)))                    # (n, hp, wp*cin)

    # ---- ReLU + conv2 (stride 1): H-pad via in-register sublane concat ------
    # ---- (no VMEM scratch round trip); taps folded into r2[dy].        ------
    a1 = jnp.maximum(bn1, 0.0).reshape(n, ho, wo * cin)
    zrow = jnp.zeros((n, 1, wo * cin), f32)
    a1p = jnp.concatenate([zrow, a1, zrow], axis=1)               # (n, ho+2, wo*cin)
    c2 = jnp.zeros((n * ho, out_ref.shape[1]), f32)
    for dy in range(3):
        slab = a1p[:, dy:dy + ho, :].reshape(n * ho, wo * cin)
        c2 = c2 + jnp.dot(slab.astype(bf16), r2_ref[dy],
                          preferred_element_type=f32)             # (n*ho, wo*cout)

    # ---- bn2 + ReLU, fully lane-dense (wo*cout lanes) unmasked store --------
    bn2 = batchnorm(c2, sc2_ref, sct2_ref, g2_ref, b2_ref)
    out_ref[...] = jnp.maximum(bn2, 0.0)


# ----------------------------- wrapper helpers --------------------------------

def _conv_rhs(w_hwio, w_in, w_out, stride):
    """Fold the horizontal taps, stride and W-padding of a 3x3 'same' conv into
    block-structured matmul weights: out_packed(row y) += slab_dy(row y) @ rhs[dy],
    where slab_dy is the dy-shifted input row in (W*Cin)-packed lanes."""
    kh, kw, ci, co = w_hwio.shape
    xin = jnp.arange(w_in)
    xout = jnp.arange(w_out)
    dx = xin[:, None] - xout[None, :] * stride + 1                # padding = 1
    valid = ((dx >= 0) & (dx < kw)).astype(w_hwio.dtype)
    tap = w_hwio[:, jnp.clip(dx, 0, kw - 1)]                      # (kh, w_in, w_out, ci, co)
    tap = tap * valid[None, :, :, None, None]
    tap = jnp.transpose(tap, (0, 1, 3, 2, 4))                     # (kh, w_in, ci, w_out, co)
    return tap.reshape(kh, w_in * ci, w_out * co)


def _channel_mats(width, c):
    """0/1 matrices mapping packed lanes (x*c + ci) <-> channels ci."""
    eye = jnp.eye(c, dtype=jnp.float32)
    reduce_m = jnp.tile(eye, (width, 1))          # (width*c, c)   lane -> channel
    return reduce_m, reduce_m.T                   # (c, width*c)   channel -> lane


def _pool_mat(wo, c, ps, wp):
    """0/1 matrix summing VALID pool windows along the packed W*C lane axis."""
    x = jnp.arange(wo)
    xp = jnp.arange(wp)
    sel = (((x[:, None] // ps) == xp[None, :]) &
           (x[:, None] < wp * ps)).astype(jnp.float32)            # (wo, wp)
    eye = jnp.eye(c, dtype=jnp.float32)
    m = sel[:, None, :, None] * eye[None, :, None, :]             # (wo, c, wp, c)
    return m.reshape(wo * c, wp * c)


def catblock_forward(x, w_aux, params, *, stride, pool_size):
    """x: (N, Cin, H, W) NCHW; w_aux: (N, Cw, Hp, Wp) NCHW (PyTorch layout)."""
    conv1_w, g1, b1, conv2_w, g2, b2 = params     # conv*: (out, in, 3, 3) OIHW
    n, cin, h, w_sp = x.shape
    cout = conv2_w.shape[0]
    eps = 1e-5
    ho = (h + 2 - 3) // stride + 1
    wo = (w_sp + 2 - 3) // stride + 1
    ps = pool_size
    hp, wp = ho // ps, wo // ps

    # boundary glue (XLA): NCHW -> packed (n, H+2, W*Cin) rows, H-pad only
    x_pk = jnp.transpose(x, (0, 2, 3, 1)).astype(jnp.float32).reshape(n, h, w_sp * cin)
    x_pk = jnp.pad(x_pk, ((0, 0), (1, 1), (0, 0)))

    # conv weights OIHW -> HWIO -> block-structured matmul weights (bf16 MXU)
    w1 = jnp.transpose(conv1_w, (2, 3, 1, 0)).astype(jnp.float32)   # (3,3,cin,cin)
    w2 = jnp.transpose(conv2_w, (2, 3, 1, 0)).astype(jnp.float32)   # (3,3,cin,cout)
    r1 = _conv_rhs(w1, w_sp, wo, stride).astype(jnp.bfloat16)       # (3, w*cin, wo*cin)
    r2 = _conv_rhs(w2, wo, wo, 1).astype(jnp.bfloat16)              # (3, wo*cin, wo*cout)

    sc1, sct1 = _channel_mats(wo, cin)
    sc2, sct2 = _channel_mats(wo, cout)
    pw = _pool_mat(wo, cin, ps, wp)

    kernel = functools.partial(
        _catblock_kernel, n=n, w=w_sp, cin=cin, ho=ho, wo=wo,
        hp=hp, wp=wp, ps=ps, stride=stride, eps=eps)

    vmem = pl.BlockSpec(memory_space=pltpu.MemorySpace.VMEM)
    out_pk, pool_pk = pl.pallas_call(
        kernel,
        out_shape=(jax.ShapeDtypeStruct((n * ho, wo * cout), jnp.float32),
                   jax.ShapeDtypeStruct((n, hp, wp * cin), jnp.float32)),
        in_specs=[vmem] * 12,
        out_specs=(vmem, vmem),
        compiler_params=pltpu.CompilerParams(vmem_limit_bytes=32 * 1024 * 1024),
    )(x_pk, r1, r2, sc1, sct1, sc2, sct2, pw,
      g1.reshape(1, cin).astype(jnp.float32), b1.reshape(1, cin).astype(jnp.float32),
      g2.reshape(1, cout).astype(jnp.float32), b2.reshape(1, cout).astype(jnp.float32))

    # boundary glue (XLA): packed -> NCHW, channel-concat the pooled branch
    out = jnp.transpose(out_pk.reshape(n, ho, wo, cout), (0, 3, 1, 2))
    pooled = jnp.transpose(pool_pk.reshape(n, hp, wp, cin), (0, 3, 1, 2))
    w_out = jnp.concatenate([w_aux.astype(jnp.float32), pooled], axis=1)
    return out, w_out


def catblock_reference(x, w, params, *, stride, pool_size):
    """Pure-JAX reference (NCHW) mirroring the PyTorch forward in train mode."""
    conv1_w, g1, b1, conv2_w, g2, b2 = params
    eps = 1e-5

    def bn(o, g, b):
        mean = o.mean(axis=(0, 2, 3), keepdims=True)
        var = ((o - mean) ** 2).mean(axis=(0, 2, 3), keepdims=True)
        return (o - mean) / jnp.sqrt(var + eps) * g.reshape(1, -1, 1, 1) + b.reshape(1, -1, 1, 1)

    dn = ('NCHW', 'OIHW', 'NCHW')
    out = lax.conv_general_dilated(x, conv1_w, (stride, stride),
                                   ((1, 1), (1, 1)), dimension_numbers=dn)
    out = bn(out, g1, b1)
    pooled = lax.reduce_window(out, 0.0, lax.add,
                               (1, 1, pool_size, pool_size),
                               (1, 1, pool_size, pool_size),
                               'VALID') / float(pool_size * pool_size)
    w_out = jnp.concatenate([w, pooled], axis=1)
    out = jnp.maximum(out, 0.0)
    out = lax.conv_general_dilated(out, conv2_w, (1, 1),
                                   ((1, 1), (1, 1)), dimension_numbers=dn)
    out = bn(out, g2, b2)
    out = jnp.maximum(out, 0.0)
    return out, w_out


if __name__ == "__main__":
    key = jax.random.PRNGKey(0)
    k = jax.random.split(key, 8)

    # CatBlock(in_planes=4, plane=8, stride=1, pool_size=16); spatial 16x16, batch 2
    n, in_planes, plane = 2, 4, 8
    h = w_sp = 16
    stride, pool_size = 1, 16
    cw = 3   # channels of the auxiliary `w` tensor being concatenated onto

    x = jax.random.normal(k[0], (n, in_planes, h, w_sp), jnp.float32)
    hp = ((h + 2 - 3) // stride + 1) // pool_size
    wp = ((w_sp + 2 - 3) // stride + 1) // pool_size
    w_in = jax.random.normal(k[1], (n, cw, hp, wp), jnp.float32)

    # deterministic parameter init (conv weights OIHW, BN affine per-channel)
    conv1_w = 0.1 * jax.random.normal(k[2], (in_planes, in_planes, 3, 3), jnp.float32)
    conv2_w = 0.1 * jax.random.normal(k[3], (plane, in_planes, 3, 3), jnp.float32)
    g1 = 1.0 + 0.1 * jax.random.normal(k[4], (in_planes,), jnp.float32)
    b1 = 0.1 * jax.random.normal(k[5], (in_planes,), jnp.float32)
    g2 = 1.0 + 0.1 * jax.random.normal(k[6], (plane,), jnp.float32)
    b2 = 0.1 * jax.random.normal(k[7], (plane,), jnp.float32)
    params = (conv1_w, g1, b1, conv2_w, g2, b2)

    out, w_out = catblock_forward(x, w_in, params, stride=stride, pool_size=pool_size)
    jax.block_until_ready((out, w_out))

    ref_out, ref_w = catblock_reference(x, w_in, params, stride=stride, pool_size=pool_size)
    assert out.shape == ref_out.shape and w_out.shape == ref_w.shape
    # bf16 MXU inputs (f32 accumulate) vs f32 reference -> 2e-2 tolerance
    assert jnp.allclose(out, ref_out, atol=2e-2, rtol=2e-2)
    assert jnp.allclose(w_out, ref_w, atol=2e-2, rtol=2e-2)

    print("KERNEL_OK")
</pallas_src>

<mosaic_0001>
module attributes {stable_mosaic.version = 11 : i64} {
  func.func @_catblock_kernel(%arg0: memref<2x18x64xf32, #tpu.memory_space<vmem>>, %arg1: memref<3x64x64xbf16, #tpu.memory_space<vmem>>, %arg2: memref<3x64x128xbf16, #tpu.memory_space<vmem>>, %arg3: memref<64x4xf32, #tpu.memory_space<vmem>>, %arg4: memref<4x64xf32, #tpu.memory_space<vmem>>, %arg5: memref<128x8xf32, #tpu.memory_space<vmem>>, %arg6: memref<8x128xf32, #tpu.memory_space<vmem>>, %arg7: memref<64x4xf32, #tpu.memory_space<vmem>>, %arg8: memref<1x4xf32, #tpu.memory_space<vmem>>, %arg9: memref<1x4xf32, #tpu.memory_space<vmem>>, %arg10: memref<1x8xf32, #tpu.memory_space<vmem>>, %arg11: memref<1x8xf32, #tpu.memory_space<vmem>>, %arg12: memref<32x128xf32, #tpu.memory_space<vmem>>, %arg13: memref<2x1x4xf32, #tpu.memory_space<vmem>>) attributes {dimension_semantics = [], scalar_prefetch = 0 : i64, scratch_operands = 0 : i64, tpu.core_type = #tpu.core_type<tc>} {
    %c0 = arith.constant 0 : index
    %c0_0 = arith.constant 0 : index
    %c0_1 = arith.constant 0 : index
    %0 = vector.load %arg0[%c0, %c0_0, %c0_1] : memref<2x18x64xf32, #tpu.memory_space<vmem>>, vector<2x18x64xf32>
    %cst = arith.constant 0.000000e+00 : f32
    %1 = vector.broadcast %cst : f32 to vector<32x64xf32>
    %2 = vector.extract_strided_slice %0 {offsets = [0, 0, 0], sizes = [2, 16, 64], strides = [1, 1, 1]} : vector<2x18x64xf32> to vector<2x16x64xf32>
    %3 = vector.shape_cast %2 : vector<2x16x64xf32> to vector<32x64xf32>
    %4 = arith.truncf %3 : vector<32x64xf32> to vector<32x64xbf16>
    %c0_2 = arith.constant 0 : index
    %c0_3 = arith.constant 0 : index
    %c0_4 = arith.constant 0 : index
    %5 = vector.load %arg1[%c0_2, %c0_3, %c0_4] : memref<3x64x64xbf16, #tpu.memory_space<vmem>>, vector<1x64x64xbf16>
    %6 = vector.shape_cast %5 : vector<1x64x64xbf16> to vector<64x64xbf16>
    %cst_5 = arith.constant dense<0.000000e+00> : vector<32x64xf32>
    %7 = tpu.matmul %4, %6, %cst_5 {dimension_numbers = #tpu.dot_dimension_numbers<[1], [0], [0], [1], [0, 0, 1, 1], [], []>} : vector<32x64xbf16>, vector<64x64xbf16>, vector<32x64xf32> -> vector<32x64xf32>
    %8 = arith.addf %1, %7 : vector<32x64xf32>
    %9 = vector.extract_strided_slice %0 {offsets = [0, 1, 0], sizes = [2, 16, 64], strides = [1, 1, 1]} : vector<2x18x64xf32> to vector<2x16x64xf32>
    %10 = vector.shape_cast %9 : vector<2x16x64xf32> to vector<32x64xf32>
    %11 = arith.truncf %10 : vector<32x64xf32> to vector<32x64xbf16>
    %c1 = arith.constant 1 : index
    %c0_6 = arith.constant 0 : index
    %c0_7 = arith.constant 0 : index
    %12 = vector.load %arg1[%c1, %c0_6, %c0_7] : memref<3x64x64xbf16, #tpu.memory_space<vmem>>, vector<1x64x64xbf16>
    %13 = vector.shape_cast %12 : vector<1x64x64xbf16> to vector<64x64xbf16>
    %cst_8 = arith.constant dense<0.000000e+00> : vector<32x64xf32>
    %14 = tpu.matmul %11, %13, %cst_8 {dimension_numbers = #tpu.dot_dimension_numbers<[1], [0], [0], [1], [0, 0, 1, 1], [], []>} : vector<32x64xbf16>, vector<64x64xbf16>, vector<32x64xf32> -> vector<32x64xf32>
    %15 = arith.addf %8, %14 : vector<32x64xf32>
    %16 = vector.extract_strided_slice %0 {offsets = [0, 2, 0], sizes = [2, 16, 64], strides = [1, 1, 1]} : vector<2x18x64xf32> to vector<2x16x64xf32>
    %17 = vector.shape_cast %16 : vector<2x16x64xf32> to vector<32x64xf32>
    %18 = arith.truncf %17 : vector<32x64xf32> to vector<32x64xbf16>
    %c2 = arith.constant 2 : index
    %c0_9 = arith.constant 0 : index
    %c0_10 = arith.constant 0 : index
    %19 = vector.load %arg1[%c2, %c0_9, %c0_10] : memref<3x64x64xbf16, #tpu.memory_space<vmem>>, vector<1x64x64xbf16>
    %20 = vector.shape_cast %19 : vector<1x64x64xbf16> to vector<64x64xbf16>
    %cst_11 = arith.constant dense<0.000000e+00> : vector<32x64xf32>
    %21 = tpu.matmul %18, %20, %cst_11 {dimension_numbers = #tpu.dot_dimension_numbers<[1], [0], [0], [1], [0, 0, 1, 1], [], []>} : vector<32x64xbf16>, vector<64x64xbf16>, vector<32x64xf32> -> vector<32x64xf32>
    %22 = arith.addf %15, %21 : vector<32x64xf32>
    %cst_12 = arith.constant dense<0.000000e+00> : vector<64xf32>
    %23 = vector.multi_reduction <add>, %22, %cst_12 [0] : vector<32x64xf32> to vector<64xf32>
    %24 = vector.shape_cast %23 : vector<64xf32> to vector<1x64xf32>
    %25 = arith.mulf %22, %22 : vector<32x64xf32>
    %cst_13 = arith.constant dense<0.000000e+00> : vector<64xf32>
    %26 = vector.multi_reduction <add>, %25, %cst_13 [0] : vector<32x64xf32> to vector<64xf32>
    %27 = vector.shape_cast %26 : vector<64xf32> to vector<1x64xf32>
    %28 = tpu.concatenate %24, %27 in 0 : vector<1x64xf32>, vector<1x64xf32> -> vector<2x64xf32>
    %c0_14 = arith.constant 0 : index
    %c0_15 = arith.constant 0 : index
    %29 = vector.load %arg3[%c0_14, %c0_15] : memref<64x4xf32, #tpu.memory_space<vmem>>, vector<64x4xf32>
    %cst_16 = arith.constant dense<0.000000e+00> : vector<2x4xf32>
    %30 = tpu.matmul %28, %29, %cst_16 {dimension_numbers = #tpu.dot_dimension_numbers<[1], [0], [0], [1], [0, 0, 1, 1], [], []>} : vector<2x64xf32>, vector<64x4xf32>, vector<2x4xf32> -> vector<2x4xf32>
    %cst_17 = arith.constant 0.001953125 : f32
    %31 = vector.broadcast %cst_17 : f32 to vector<2x4xf32>
    %32 = arith.mulf %30, %31 : vector<2x4xf32>
    %33 = vector.extract_strided_slice %32 {offsets = [0, 0], sizes = [1, 4], strides = [1, 1]} : vector<2x4xf32> to vector<1x4xf32>
    %34 = vector.extract_strided_slice %32 {offsets = [1, 0], sizes = [1, 4], strides = [1, 1]} : vector<2x4xf32> to vector<1x4xf32>
    %35 = arith.mulf %33, %33 : vector<1x4xf32>
    %36 = arith.subf %34, %35 : vector<1x4xf32>
    %c0_18 = arith.constant 0 : index
    %c0_19 = arith.constant 0 : index
    %37 = vector.load %arg8[%c0_18, %c0_19] : memref<1x4xf32, #tpu.memory_space<vmem>>, vector<1x4xf32>
    %cst_20 = arith.constant 9.99999974E-6 : f32
    %38 = vector.broadcast %cst_20 : f32 to vector<1x4xf32>
    %39 = arith.addf %36, %38 : vector<1x4xf32>
    %40 = math.rsqrt %39 : vector<1x4xf32>
    %41 = arith.mulf %37, %40 : vector<1x4xf32>
    %c0_21 = arith.constant 0 : index
    %c0_22 = arith.constant 0 : index
    %42 = vector.load %arg9[%c0_21, %c0_22] : memref<1x4xf32, #tpu.memory_space<vmem>>, vector<1x4xf32>
    %43 = arith.mulf %33, %41 : vector<1x4xf32>
    %44 = arith.subf %42, %43 : vector<1x4xf32>
    %45 = tpu.concatenate %41, %44 in 0 : vector<1x4xf32>, vector<1x4xf32> -> vector<2x4xf32>
    %c0_23 = arith.constant 0 : index
    %c0_24 = arith.constant 0 : index
    %46 = vector.load %arg4[%c0_23, %c0_24] : memref<4x64xf32, #tpu.memory_space<vmem>>, vector<4x64xf32>
    %cst_25 = arith.constant dense<0.000000e+00> : vector<2x64xf32>
    %47 = tpu.matmul %45, %46, %cst_25 {dimension_numbers = #tpu.dot_dimension_numbers<[1], [0], [0], [1], [0, 0, 1, 1], [], []>} : vector<2x4xf32>, vector<4x64xf32>, vector<2x64xf32> -> vector<2x64xf32>
    %48 = vector.extract_strided_slice %47 {offsets = [0, 0], sizes = [1, 64], strides = [1, 1]} : vector<2x64xf32> to vector<1x64xf32>
    %49 = vector.broadcast %48 : vector<1x64xf32> to vector<32x64xf32>
    %50 = arith.mulf %22, %49 : vector<32x64xf32>
    %51 = vector.extract_strided_slice %47 {offsets = [1, 0], sizes = [1, 64], strides = [1, 1]} : vector<2x64xf32> to vector<1x64xf32>
    %52 = vector.broadcast %51 : vector<1x64xf32> to vector<32x64xf32>
    %53 = arith.addf %50, %52 : vector<32x64xf32>
    %c0_26 = arith.constant 0 : index
    %c0_27 = arith.constant 0 : index
    %54 = vector.load %arg7[%c0_26, %c0_27] : memref<64x4xf32, #tpu.memory_space<vmem>>, vector<64x4xf32>
    %cst_28 = arith.constant dense<0.000000e+00> : vector<32x4xf32>
    %55 = tpu.matmul %53, %54, %cst_28 {dimension_numbers = #tpu.dot_dimension_numbers<[1], [0], [0], [1], [0, 0, 1, 1], [], []>} : vector<32x64xf32>, vector<64x4xf32>, vector<32x4xf32> -> vector<32x4xf32>
    %56 = vector.shape_cast %55 : vector<32x4xf32> to vector<2x16x4xf32>
    %57 = vector.shape_cast %56 : vector<2x16x4xf32> to vector<2x1x16x4xf32>
    %cst_29 = arith.constant dense<0.000000e+00> : vector<2x1x4xf32>
    %58 = vector.multi_reduction <add>, %57, %cst_29 [2] : vector<2x1x16x4xf32> to vector<2x1x4xf32>
    %cst_30 = arith.constant 3.906250e-03 : f32
    %59 = vector.broadcast %cst_30 : f32 to vector<2x1x4xf32>
    %60 = arith.mulf %58, %59 : vector<2x1x4xf32>
    %c0_31 = arith.constant 0 : index
    %c0_32 = arith.constant 0 : index
    %c0_33 = arith.constant 0 : index
    %61 = vector.load %arg13[%c0_31, %c0_32, %c0_33] : memref<2x1x4xf32, #tpu.memory_space<vmem>>, vector<2x1x4xf32>
    tpu.vector_store %arg13[%c0_31, %c0_32, %c0_33], %60 {strides = array<i32>} : memref<2x1x4xf32, #tpu.memory_space<vmem>>, vector<2x1x4xf32>,
    %cst_34 = arith.constant 0.000000e+00 : f32
    %62 = vector.broadcast %cst_34 : f32 to vector<32x64xf32>
    %63 = arith.maximumf %53, %62 : vector<32x64xf32>
    %64 = vector.shape_cast %63 : vector<32x64xf32> to vector<2x16x64xf32>
    %cst_35 = arith.constant 0.000000e+00 : f32
    %65 = vector.broadcast %cst_35 : f32 to vector<2x1x64xf32>
    %66 = tpu.concatenate %65, %64, %65 in 1 : vector<2x1x64xf32>, vector<2x16x64xf32>, vector<2x1x64xf32> -> vector<2x18x64xf32>
    %cst_36 = arith.constant 0.000000e+00 : f32
    %67 = vector.broadcast %cst_36 : f32 to vector<32x128xf32>
    %68 = vector.extract_strided_slice %66 {offsets = [0, 0, 0], sizes = [2, 16, 64], strides = [1, 1, 1]} : vector<2x18x64xf32> to vector<2x16x64xf32>
    %69 = vector.shape_cast %68 : vector<2x16x64xf32> to vector<32x64xf32>
    %70 = arith.truncf %69 : vector<32x64xf32> to vector<32x64xbf16>
    %c0_37 = arith.constant 0 : index
    %c0_38 = arith.constant 0 : index
    %c0_39 = arith.constant 0 : index
    %71 = vector.load %arg2[%c0_37, %c0_38, %c0_39] : memref<3x64x128xbf16, #tpu.memory_space<vmem>>, vector<1x64x128xbf16>
    %72 = vector.shape_cast %71 : vector<1x64x128xbf16> to vector<64x128xbf16>
    %cst_40 = arith.constant dense<0.000000e+00> : vector<32x128xf32>
    %73 = tpu.matmul %70, %72, %cst_40 {dimension_numbers = #tpu.dot_dimension_numbers<[1], [0], [0], [1], [0, 0, 1, 1], [], []>} : vector<32x64xbf16>, vector<64x128xbf16>, vector<32x128xf32> -> vector<32x128xf32>
    %74 = arith.addf %67, %73 : vector<32x128xf32>
    %75 = vector.extract_strided_slice %66 {offsets = [0, 1, 0], sizes = [2, 16, 64], strides = [1, 1, 1]} : vector<2x18x64xf32> to vector<2x16x64xf32>
    %76 = vector.shape_cast %75 : vector<2x16x64xf32> to vector<32x64xf32>
    %77 = arith.truncf %76 : vector<32x64xf32> to vector<32x64xbf16>
    %c1_41 = arith.constant 1 : index
    %c0_42 = arith.constant 0 : index
    %c0_43 = arith.constant 0 : index
    %78 = vector.load %arg2[%c1_41, %c0_42, %c0_43] : memref<3x64x128xbf16, #tpu.memory_space<vmem>>, vector<1x64x128xbf16>
    %79 = vector.shape_cast %78 : vector<1x64x128xbf16> to vector<64x128xbf16>
    %cst_44 = arith.constant dense<0.000000e+00> : vector<32x128xf32>
    %80 = tpu.matmul %77, %79, %cst_44 {dimension_numbers = #tpu.dot_dimension_numbers<[1], [0], [0], [1], [0, 0, 1, 1], [], []>} : vector<32x64xbf16>, vector<64x128xbf16>, vector<32x128xf32> -> vector<32x128xf32>
    %81 = arith.addf %74, %80 : vector<32x128xf32>
    %82 = vector.extract_strided_slice %66 {offsets = [0, 2, 0], sizes = [2, 16, 64], strides = [1, 1, 1]} : vector<2x18x64xf32> to vector<2x16x64xf32>
    %83 = vector.shape_cast %82 : vector<2x16x64xf32> to vector<32x64xf32>
    %84 = arith.truncf %83 : vector<32x64xf32> to vector<32x64xbf16>
    %c2_45 = arith.constant 2 : index
    %c0_46 = arith.constant 0 : index
    %c0_47 = arith.constant 0 : index
    %85 = vector.load %arg2[%c2_45, %c0_46, %c0_47] : memref<3x64x128xbf16, #tpu.memory_space<vmem>>, vector<1x64x128xbf16>
    %86 = vector.shape_cast %85 : vector<1x64x128xbf16> to vector<64x128xbf16>
    %cst_48 = arith.constant dense<0.000000e+00> : vector<32x128xf32>
    %87 = tpu.matmul %84, %86, %cst_48 {dimension_numbers = #tpu.dot_dimension_numbers<[1], [0], [0], [1], [0, 0, 1, 1], [], []>} : vector<32x64xbf16>, vector<64x128xbf16>, vector<32x128xf32> -> vector<32x128xf32>
    %88 = arith.addf %81, %87 : vector<32x128xf32>
    %cst_49 = arith.constant dense<0.000000e+00> : vector<128xf32>
    %89 = vector.multi_reduction <add>, %88, %cst_49 [0] : vector<32x128xf32> to vector<128xf32>
    %90 = vector.shape_cast %89 : vector<128xf32> to vector<1x128xf32>
    %91 = arith.mulf %88, %88 : vector<32x128xf32>
    %cst_50 = arith.constant dense<0.000000e+00> : vector<128xf32>
    %92 = vector.multi_reduction <add>, %91, %cst_50 [0] : vector<32x128xf32> to vector<128xf32>
    %93 = vector.shape_cast %92 : vector<128xf32> to vector<1x128xf32>
    %94 = tpu.concatenate %90, %93 in 0 : vector<1x128xf32>, vector<1x128xf32> -> vector<2x128xf32>
    %c0_51 = arith.constant 0 : index
    %c0_52 = arith.constant 0 : index
    %95 = vector.load %arg5[%c0_51, %c0_52] : memref<128x8xf32, #tpu.memory_space<vmem>>, vector<128x8xf32>
    %cst_53 = arith.constant dense<0.000000e+00> : vector<2x8xf32>
    %96 = tpu.matmul %94, %95, %cst_53 {dimension_numbers = #tpu.dot_dimension_numbers<[1], [0], [0], [1], [0, 0, 1, 1], [], []>} : vector<2x128xf32>, vector<128x8xf32>, vector<2x8xf32> -> vector<2x8xf32>
    %cst_54 = arith.constant 0.001953125 : f32
    %97 = vector.broadcast %cst_54 : f32 to vector<2x8xf32>
    %98 = arith.mulf %96, %97 : vector<2x8xf32>
    %99 = vector.extract_strided_slice %98 {offsets = [0, 0], sizes = [1, 8], strides = [1, 1]} : vector<2x8xf32> to vector<1x8xf32>
    %100 = vector.extract_strided_slice %98 {offsets = [1, 0], sizes = [1, 8], strides = [1, 1]} : vector<2x8xf32> to vector<1x8xf32>
    %101 = arith.mulf %99, %99 : vector<1x8xf32>
    %102 = arith.subf %100, %101 : vector<1x8xf32>
    %c0_55 = arith.constant 0 : index
    %c0_56 = arith.constant 0 : index
    %103 = vector.load %arg10[%c0_55, %c0_56] : memref<1x8xf32, #tpu.memory_space<vmem>>, vector<1x8xf32>
    %cst_57 = arith.constant 9.99999974E-6 : f32
    %104 = vector.broadcast %cst_57 : f32 to vector<1x8xf32>
    %105 = arith.addf %102, %104 : vector<1x8xf32>
    %106 = math.rsqrt %105 : vector<1x8xf32>
    %107 = arith.mulf %103, %106 : vector<1x8xf32>
    %c0_58 = arith.constant 0 : index
    %c0_59 = arith.constant 0 : index
    %108 = vector.load %arg11[%c0_58, %c0_59] : memref<1x8xf32, #tpu.memory_space<vmem>>, vector<1x8xf32>
    %109 = arith.mulf %99, %107 : vector<1x8xf32>
    %110 = arith.subf %108, %109 : vector<1x8xf32>
    %111 = tpu.concatenate %107, %110 in 0 : vector<1x8xf32>, vector<1x8xf32> -> vector<2x8xf32>
    %c0_60 = arith.constant 0 : index
    %c0_61 = arith.constant 0 : index
    %112 = vector.load %arg6[%c0_60, %c0_61] : memref<8x128xf32, #tpu.memory_space<vmem>>, vector<8x128xf32>
    %cst_62 = arith.constant dense<0.000000e+00> : vector<2x128xf32>
    %113 = tpu.matmul %111, %112, %cst_62 {dimension_numbers = #tpu.dot_dimension_numbers<[1], [0], [0], [1], [0, 0, 1, 1], [], []>} : vector<2x8xf32>, vector<8x128xf32>, vector<2x128xf32> -> vector<2x128xf32>
    %114 = vector.extract_strided_slice %113 {offsets = [0, 0], sizes = [1, 128], strides = [1, 1]} : vector<2x128xf32> to vector<1x128xf32>
    %115 = vector.broadcast %114 : vector<1x128xf32> to vector<32x128xf32>
    %116 = arith.mulf %88, %115 : vector<32x128xf32>
    %117 = vector.extract_strided_slice %113 {offsets = [1, 0], sizes = [1, 128], strides = [1, 1]} : vector<2x128xf32> to vector<1x128xf32>
    %118 = vector.broadcast %117 : vector<1x128xf32> to vector<32x128xf32>
    %119 = arith.addf %116, %118 : vector<32x128xf32>
    %cst_63 = arith.constant 0.000000e+00 : f32
    %120 = vector.broadcast %cst_63 : f32 to vector<32x128xf32>
    %121 = arith.maximumf %119, %120 : vector<32x128xf32>
    %c0_64 = arith.constant 0 : index
    %c0_65 = arith.constant 0 : index
    %122 = vector.load %arg12[%c0_64, %c0_65] : memref<32x128xf32, #tpu.memory_space<vmem>>, vector<32x128xf32>
    tpu.vector_store %arg12[%c0_64, %c0_65], %121 {strides = array<i32>} : memref<32x128xf32, #tpu.memory_space<vmem>>, vector<32x128xf32>,
    return
  }
}

</mosaic_0001>

<llo_original>
// kernel: tpu_custom_call.1
$region0: #{tpu_custom_call.1}
  #allocation0 [shape = 'u32[]', space=smem, size = 0x4, offset = 0x4, fixed_abs, tag = 'smem constant byte address 0x4 - core index']
  #allocation1 [shape = 'u32[72,128]{1,0:T(1,128)}', space=vmem, size = 0x9000, scoped, tag = 'internal scratch']
  %s0 = inlined_call_operand.vmem [shape: f32[2,18,64], index: 0, kind: input, shape index: {}]
  %s1 = inlined_call_operand.vmem [shape: bf16[3,64,64], index: 1, kind: input, shape index: {}]
  %s2 = inlined_call_operand.vmem [shape: bf16[3,64,128], index: 2, kind: input, shape index: {}]
  %s3 = inlined_call_operand.vmem [shape: f32[64,4], index: 3, kind: input, shape index: {}]
  %s4 = inlined_call_operand.vmem [shape: f32[4,64], index: 4, kind: input, shape index: {}]
  %s5 = inlined_call_operand.vmem [shape: f32[128,8], index: 5, kind: input, shape index: {}]
  %s6 = inlined_call_operand.vmem [shape: f32[8,128], index: 6, kind: input, shape index: {}]
  %s7 = inlined_call_operand.vmem [shape: f32[64,4], index: 7, kind: input, shape index: {}]
  %s8 = inlined_call_operand.vmem [shape: f32[1,4], index: 8, kind: input, shape index: {}]
  %s9 = inlined_call_operand.vmem [shape: f32[1,4], index: 9, kind: input, shape index: {}]
  %s10 = inlined_call_operand.vmem [shape: f32[1,8], index: 10, kind: input, shape index: {}]
  %s11 = inlined_call_operand.vmem [shape: f32[1,8], index: 11, kind: input, shape index: {}]
  %s12 = inlined_call_operand.hbm [shape: f32[32,128], index: 12, kind: output, shape index: {0}]
  %s13 = inlined_call_operand.hbm [shape: f32[2,1,4], index: 13, kind: output, shape index: {1}]
  %14 = xla_tuple %s12, %s13
  %s15 = sld [smem:[#allocation0]]
  $region66: #{tpu_custom_call.1} parent=0
    _
  %s17 = ssub.s32 1, %s15
  %s18 = scalar_select 0, %s17, %s15
  $region1: #{tpu_custom_call.1} parent=0
    #allocation2 [shape = 'u8[16384]{0}', space=vmem, size = 0x4000, scoped, tag = 'output window, operand 0, single buffered']
    #allocation3 [shape = 's32[1]{0}', space=sflag, size = 0x4, scoped, tag = 'scoped memory for tpu_custom_call.1']
    #allocation4 [shape = 'u8[1024]{0}', space=vmem, size = 0x400, scoped, tag = 'output window, operand 1, single buffered']
    #allocation5 [shape = 's32[1]{0}', space=sflag, size = 0x4, scoped, tag = 'scoped memory for tpu_custom_call.1']
    %19 = vsyncpa [#allocation3], 0
    %20 = vsyncpa [#allocation5], 0
    // Predicated region
    $region2: #{tpu_custom_call.1} parent=1 // pred_check
      _
    $region3: #{tpu_custom_call.1} parent=1 // pred_check_branch
      %22 = sbr.rel (0) target = $region5
    $region4: #{tpu_custom_call.1} parent=1 // pred_region
      _
    $region5: #{tpu_custom_call.1} parent=1 // pred_fallthru
      _
    // Predicated region
    $region6: #{tpu_custom_call.1} parent=1 // pred_check
      _
    $region7: #{tpu_custom_call.1} parent=1 // pred_check_branch
      %24 = sbr.rel (0) target = $region9
    $region8: #{tpu_custom_call.1} parent=1 // pred_region
      _
    $region9: #{tpu_custom_call.1} parent=1 // pred_fallthru
      _
    // Predicated region
    $region10: #{tpu_custom_call.1} parent=1 // pred_check
      _
    $region11: #{tpu_custom_call.1} parent=1 // pred_check_branch
      %26 = sbr.rel (0) target = $region13
    $region12: #{tpu_custom_call.1} parent=1 // pred_region
      _
    $region13: #{tpu_custom_call.1} parent=1 // pred_fallthru
      _
    // Predicated region
    $region14: #{tpu_custom_call.1} parent=1 // pred_check
      _
    $region15: #{tpu_custom_call.1} parent=1 // pred_check_branch
      %28 = sbr.rel (0) target = $region17
    $region16: #{tpu_custom_call.1} parent=1 // pred_region
      _
    $region17: #{tpu_custom_call.1} parent=1 // pred_fallthru
      _
    // Predicated region
    $region18: #{tpu_custom_call.1} parent=1 // pred_check
      _
    $region19: #{tpu_custom_call.1} parent=1 // pred_check_branch
      %30 = sbr.rel (0) target = $region21
    $region20: #{tpu_custom_call.1} parent=1 // pred_region
      _
    $region21: #{tpu_custom_call.1} parent=1 // pred_fallthru
      _
    // Predicated region
    $region22: #{tpu_custom_call.1} parent=1 // pred_check
      _
    $region23: #{tpu_custom_call.1} parent=1 // pred_check_branch
      %32 = sbr.rel (0) target = $region25
    $region24: #{tpu_custom_call.1} parent=1 // pred_region
      _
    $region25: #{tpu_custom_call.1} parent=1 // pred_fallthru
      _
    // Predicated region
    $region26: #{tpu_custom_call.1} parent=1 // pred_check
      _
    $region27: #{tpu_custom_call.1} parent=1 // pred_check_branch
      %34 = sbr.rel (0) target = $region29
    $region28: #{tpu_custom_call.1} parent=1 // pred_region
      _
    $region29: #{tpu_custom_call.1} parent=1 // pred_fallthru
      _
    // Predicated region
    $region30: #{tpu_custom_call.1} parent=1 // pred_check
      _
    $region31: #{tpu_custom_call.1} parent=1 // pred_check_branch
      %36 = sbr.rel (0) target = $region33
    $region32: #{tpu_custom_call.1} parent=1 // pred_region
      _
    $region33: #{tpu_custom_call.1} parent=1 // pred_fallthru
      _
    // Predicated region
    $region34: #{tpu_custom_call.1} parent=1 // pred_check
      _
    $region35: #{tpu_custom_call.1} parent=1 // pred_check_branch
      %38 = sbr.rel (0) target = $region37
    $region36: #{tpu_custom_call.1} parent=1 // pred_region
      _
    $region37: #{tpu_custom_call.1} parent=1 // pred_fallthru
      _
    // Predicated region
    $region38: #{tpu_custom_call.1} parent=1 // pred_check
      _
    $region39: #{tpu_custom_call.1} parent=1 // pred_check_branch
      %40 = sbr.rel (0) target = $region41
    $region40: #{tpu_custom_call.1} parent=1 // pred_region
      _
    $region41: #{tpu_custom_call.1} parent=1 // pred_fallthru
      _
    // Predicated region
    $region42: #{tpu_custom_call.1} parent=1 // pred_check
      _
    $region43: #{tpu_custom_call.1} parent=1 // pred_check_branch
      %42 = sbr.rel (0) target = $region45
    $region44: #{tpu_custom_call.1} parent=1 // pred_region
      _
    $region45: #{tpu_custom_call.1} parent=1 // pred_fallthru
      _
    // Predicated region
    $region46: #{tpu_custom_call.1} parent=1 // pred_check
      _
    $region47: #{tpu_custom_call.1} parent=1 // pred_check_branch
      %44 = sbr.rel (0) target = $region49
    $region48: #{tpu_custom_call.1} parent=1 // pred_region
      _
    $region49: #{tpu_custom_call.1} parent=1 // pred_fallthru
      _
    %v46 = vld [vmem:[%s0] sm:$0xff]
    %v47 = vld [vmem:[%s0 + $0x8] sm:$0xff]
    %v48 = vld [vmem:[%s0 + $0x10] sm:$0x3]
    %v49 = vld [vmem:[%s0 + $0x18] sm:$0xff]
    %v50 = vld [vmem:[%s0 + $0x20] sm:$0xff]
    %v51 = vld [vmem:[%s0 + $0x28] sm:$0x3]
    %v52 = vpack.c.bf16 %v47, %v46
    %v53 = vpack.c.bf16 %v50, %v49
    %v54 = vld [vmem:[%s1] sm:$0xf]
    %v55 = vld [vmem:[%s1 + $0x4] sm:$0xf]
    %v56 = vld [vmem:[%s1 + $0x8] sm:$0xf]
    %v57 = vld [vmem:[%s1 + $0xc] sm:$0xf]
    %v58 = vld [vmem:[%s1 + $0x10] sm:$0xf]
    %v59 = vld [vmem:[%s1 + $0x14] sm:$0xf]
    %v60 = vld [vmem:[%s1 + $0x18] sm:$0xf]
    %v61 = vld [vmem:[%s1 + $0x1c] sm:$0xf]
    %vm68 = vcmask 1046528
    %v69 = vrot.slane %v46, 1
    %v70 = vrot.slane %v47, 1
    %v71 = vsel %vm68, %v69, %v70
    %v72 = vrot.slane %v48, 1
    %v73 = vsel %vm68, %v70, %v72
    %v74 = vrot.slane %v49, 1
    %v75 = vrot.slane %v50, 1
    %v76 = vsel %vm68, %v74, %v75
    %v77 = vrot.slane %v51, 1
    %v78 = vsel %vm68, %v75, %v77
    %v83 = vpack.c.bf16 %v73, %v71
    %v84 = vpack.c.bf16 %v78, %v76
    %s85 = scalar_lea.vmem %s1, 32
    %v86 = vld [vmem:[%s85] sm:$0xf]
    %v87 = vld [vmem:[%s85 + $0x4] sm:$0xf]
    %v88 = vld [vmem:[%s85 + $0x8] sm:$0xf]
    %v89 = vld [vmem:[%s85 + $0xc] sm:$0xf]
    %v90 = vld [vmem:[%s85 + $0x10] sm:$0xf]
    %v91 = vld [vmem:[%s85 + $0x14] sm:$0xf]
    %v92 = vld [vmem:[%s85 + $0x18] sm:$0xf]
    %v93 = vld [vmem:[%s85 + $0x1c] sm:$0xf]
    %v102 = vunpack.c.l.b16 %v86
    %v103 = vunpack.c.l.b16 %v87
    %v104 = vunpack.c.l.b16 %v88
    %v105 = vunpack.c.l.b16 %v89
    %v106 = vunpack.c.l.b16 %v90
    %v107 = vunpack.c.l.b16 %v91
    %v108 = vunpack.c.l.b16 %v92
    %v109 = vunpack.c.l.b16 %v93
    %v110 = vpack.c.b16 %v103, %v102
    %v111 = vpack.c.b16 %v105, %v104
    %v112 = vpack.c.b16 %v107, %v106
    %v113 = vpack.c.b16 %v109, %v108
    %vm118 = vcmask 523264
    %v120 = vsel %vm118, %v83, 0
    %v123 = vsel %vm118, %v84, 0
    %125 = vmatpush.bf16.msra.mxu0 0
    %126 = vmatpush.bf16.msra.mxu0 0
    %127 = vmatpush.bf16.msra.mxu0 0
    %128 = vmatpush.bf16.msra.mxu0 0
    %129 = vmatpush.bf16.msra.mxu0 %v113
    %130 = vmatpush.bf16.msra.mxu0 %v112
    %131 = vmatpush.bf16.msra.mxu0 %v111
    %132 = vmatpush.bf16.msra.mxu0 %v110
    %133 = vmatmul.bf16.gmra.mxu0 %v120
    %v134 = vpop.f32.mrf.mxu0
    %v135 = vadd.f32 0.0, %v134
    %v136 = vpop.f32.mrf.mxu0
    %v137 = vadd.f32 0.0, %v136
    %138 = vmatmul.bf16.gmra.mxu0 %v123
    %v139 = vpop.f32.mrf.mxu0
    %v140 = vadd.f32 0.0, %v139
    %v141 = vpop.f32.mrf.mxu0
    %v142 = vadd.f32 0.0, %v141
    %143 = vdwg.mxu0
    %v152 = vunpack.c.l.b16 %v54
    %v153 = vunpack.c.l.b16 %v55
    %v154 = vunpack.c.l.b16 %v56
    %v155 = vunpack.c.l.b16 %v57
    %v156 = vunpack.c.l.b16 %v58
    %v157 = vunpack.c.l.b16 %v59
    %v158 = vunpack.c.l.b16 %v60
    %v159 = vunpack.c.l.b16 %v61
    %v160 = vpack.c.b16 %v153, %v152
    %v161 = vpack.c.b16 %v155, %v154
    %v162 = vpack.c.b16 %v157, %v156
    %v163 = vpack.c.b16 %v159, %v158
    %v169 = vsel %vm118, %v52, 0
    %v172 = vsel %vm118, %v53, 0
    %174 = vmatpush.bf16.msra.mxu0 0
    %175 = vmatpush.bf16.msra.mxu0 0
    %176 = vmatpush.bf16.msra.mxu0 0
    %177 = vmatpush.bf16.msra.mxu0 0
    %178 = vmatpush.bf16.msra.mxu0 %v163
    %179 = vmatpush.bf16.msra.mxu0 %v162
    %180 = vmatpush.bf16.msra.mxu0 %v161
    %181 = vmatpush.bf16.msra.mxu0 %v160
    %182 = vmatmul.bf16.gmra.mxu0 %v169
    %v183 = vpop.f32.mrf.mxu0
    %v184 = vadd.f32 %v135, %v183
    %v185 = vpop.f32.mrf.mxu0
    %v186 = vadd.f32 %v137, %v185
    %187 = vmatmul.bf16.gmra.mxu0 %v172
    %v188 = vpop.f32.mrf.mxu0
    %v189 = vadd.f32 %v140, %v188
    %v190 = vpop.f32.mrf.mxu0
    %v191 = vadd.f32 %v142, %v190
    %192 = vdwg.mxu0
    %vm193 = vcmask 1045504
    %v194 = vrot.slane %v46, 2
    %v195 = vrot.slane %v47, 2
    %v196 = vsel %vm193, %v194, %v195
    %v197 = vrot.slane %v48, 2
    %v198 = vsel %vm193, %v195, %v197
    %v199 = vrot.slane %v49, 2
    %v200 = vrot.slane %v50, 2
    %v201 = vsel %vm193, %v199, %v200
    %v202 = vrot.slane %v51, 2
    %v203 = vsel %vm193, %v200, %v202
    %v208 = vpack.c.bf16 %v198, %v196
    %v209 = vpack.c.bf16 %v203, %v201
    %s210 = scalar_lea.vmem %s1, 64
    %v211 = vld [vmem:[%s210] sm:$0xf]
    %v212 = vld [vmem:[%s210 + $0x4] sm:$0xf]
    %v213 = vld [vmem:[%s210 + $0x8] sm:$0xf]
    %v214 = vld [vmem:[%s210 + $0xc] sm:$0xf]
    %v215 = vld [vmem:[%s210 + $0x10] sm:$0xf]
    %v216 = vld [vmem:[%s210 + $0x14] sm:$0xf]
    %v217 = vld [vmem:[%s210 + $0x18] sm:$0xf]
    %v218 = vld [vmem:[%s210 + $0x1c] sm:$0xf]
    %v227 = vunpack.c.l.b16 %v211
    %v228 = vunpack.c.l.b16 %v212
    %v229 = vunpack.c.l.b16 %v213
    %v230 = vunpack.c.l.b16 %v214
    %v231 = vunpack.c.l.b16 %v215
    %v232 = vunpack.c.l.b16 %v216
    %v233 = vunpack.c.l.b16 %v217
    %v234 = vunpack.c.l.b16 %v218
    %v235 = vpack.c.b16 %v228, %v227
    %v236 = vpack.c.b16 %v230, %v229
    %v237 = vpack.c.b16 %v232, %v231
    %v238 = vpack.c.b16 %v234, %v233
    %v244 = vsel %vm118, %v208, 0
    %v247 = vsel %vm118, %v209, 0
    %249 = vmatpush.bf16.msra.mxu0 0
    %250 = vmatpush.bf16.msra.mxu0 0
    %251 = vmatpush.bf16.msra.mxu0 0
    %252 = vmatpush.bf16.msra.mxu0 0
    %253 = vmatpush.bf16.msra.mxu0 %v238
    %254 = vmatpush.bf16.msra.mxu0 %v237
    %255 = vmatpush.bf16.msra.mxu0 %v236
    %256 = vmatpush.bf16.msra.mxu0 %v235
    %257 = vmatmul.bf16.gmra.mxu0 %v244
    %v258 = vpop.f32.mrf.mxu0
    %v259 = vadd.f32 0.0, %v258
    %v260 = vpop.f32.mrf.mxu0
    %v261 = vadd.f32 0.0, %v260
    %262 = vmatmul.bf16.gmra.mxu0 %v247
    %v263 = vpop.f32.mrf.mxu0
    %v264 = vadd.f32 0.0, %v263
    %v265 = vpop.f32.mrf.mxu0
    %v266 = vadd.f32 0.0, %v265
    %267 = vdwg.mxu0
    %v268 = vadd.f32 %v184, %v259
    %v269 = vadd.f32 %v186, %v261
    %v270 = vadd.f32 %v189, %v264
    %v271 = vadd.f32 %v191, %v266
    %v272 = vsel %vm118, %v268, 0.0
    %v273 = vsel %vm118, %v269, 0.0
    %v274 = vadd.f32 %v272, %v273
    %v275 = vsel %vm118, %v270, 0.0
    %v276 = vadd.f32 %v274, %v275
    %v277 = vsel %vm118, %v271, 0.0
    %v278 = vadd.f32 %v276, %v277
    %v279 = vrot.slane %v278, 4
    %v280 = vadd.f32 %v278, %v279
    %v281 = vrot.slane %v280, 2
    %v282 = vadd.f32 %v280, %v281
    %v283 = vrot.slane %v282, 1
    %v284 = vadd.f32 %v282, %v283
    %v285 = vmul.f32 %v268, %v268
    %v286 = vmul.f32 %v269, %v269
    %v287 = vmul.f32 %v270, %v270
    %v288 = vmul.f32 %v271, %v271
    %v289 = vsel %vm118, %v285, 0.0
    %v290 = vsel %vm118, %v286, 0.0
    %v291 = vadd.f32 %v289, %v290
    %v292 = vsel %vm118, %v287, 0.0
    %v293 = vadd.f32 %v291, %v292
    %v294 = vsel %vm118, %v288, 0.0
    %v295 = vadd.f32 %v293, %v294
    %v296 = vrot.slane %v295, 4
    %v297 = vadd.f32 %v295, %v296
    %v298 = vrot.slane %v297, 2
    %v299 = vadd.f32 %v297, %v298
    %v300 = vrot.slane %v299, 1
    %v301 = vadd.f32 %v299, %v300
    %vm302 = vcmask 1040384
    %v303 = vsel %vm302, %v284, %v301
    %v304 = vld [vmem:[%s3] sm:$0xff]
    %v305 = vld [vmem:[%s3 + $0x8] sm:$0xff]
    %v306 = vld [vmem:[%s3 + $0x10] sm:$0xff]
    %v307 = vld [vmem:[%s3 + $0x18] sm:$0xff]
    %v308 = vld [vmem:[%s3 + $0x20] sm:$0xff]
    %v309 = vld [vmem:[%s3 + $0x28] sm:$0xff]
    %v310 = vld [vmem:[%s3 + $0x30] sm:$0xff]
    %v311 = vld [vmem:[%s3 + $0x38] sm:$0xff]
    %v313 = vsel %vm118, %v303, 0
    %315 = vmatpush.msra.mxu0 0.0
    %316 = vmatpush.msra.mxu0 0.0
    %317 = vmatpush.msra.mxu0 0.0
    %318 = vmatpush.msra.mxu0 0.0
    %319 = vmatpush.msra.mxu0 0.0
    %320 = vmatpush.msra.mxu0 0.0
    %321 = vmatpush.msra.mxu0 0.0
    %322 = vmatpush.msra.mxu0 0.0
    %323 = vmatpush.msra.mxu0 %v311
    %324 = vmatpush.msra.mxu0 %v310
    %325 = vmatpush.msra.mxu0 %v309
    %326 = vmatpush.msra.mxu0 %v308
    %327 = vmatpush.msra.mxu0 %v307
    %328 = vmatpush.msra.mxu0 %v306
    %329 = vmatpush.msra.mxu0 %v305
    %330 = vmatpush.msra.mxu0 %v304
    %331 = vmatmul.f32.gmra.mxu0 %v313
    %v332 = vpop.f32.mrf.mxu0
    %v333 = vadd.f32 0.0, %v332
    %334 = vdwg.mxu0
    %v335 = vmul.f32 %v333, 0.001953125
    %v336 = vmul.f32 %v335, %v335
    %v338 = vrot.slane %v336, 7
    %v340 = vsub.f32 %v335, %v338
    %v341 = vld [vmem:[%s8] sm:$0x1]
    %v342 = vadd.f32 %v340, 1e-05
    %v343 = vrsqrt.pop %v342
    %v344 = vmul.f32 %v343, %v342
    %v345 = vmul.f32 %v344, %v343
    %v346 = vmul.f32 0.5, %v345
    %v347 = vsub.f32 1.5, %v346
    %v348 = vmul.f32 %v343, %v347
    %vm349 = vweird.f32 %v342
    %vm350 = vweird.f32 %v343
    %vm351 = vmor %vm349, %vm350
    %v352 = vsel %vm351, %v343, %v348
    %354 = vst [vmem:[#allocation1] sm:$0xff] %v352
    %s355 = scalar_lea.vmem [#allocation1], 1
    %v356 = vld [vmem:[%s355] ss:$9 sm:$0xff]
    %v358 = vmul.f32 %v341, %v356
    %v359 = vld [vmem:[%s9] sm:$0x1]
    %v360 = vmul.f32 %v335, %v358
    %v361 = vsub.f32 %v359, %v360
    %v363 = vperm.slane %v361, 0
    %v365 = vsel %vm302, %v358, %v363
    %v366 = vld [vmem:[%s4] sm:$0xf]
    %vm367 = vcmask 31744
    %v369 = vsel %vm367, %v365, 0
    %vm371 = vcmask 1043456
    %v373 = vsel %vm371, %v366, 0
    %375 = vmatpush.msra.mxu0 0.0
    %376 = vmatpush.msra.mxu0 0.0
    %377 = vmatpush.msra.mxu0 0.0
    %378 = vmatpush.msra.mxu0 0.0
    %379 = vmatpush.msra.mxu0 0.0
    %380 = vmatpush.msra.mxu0 0.0
    %381 = vmatpush.msra.mxu0 0.0
    %382 = vmatpush.msra.mxu0 0.0
    %383 = vmatpush.msra.mxu0 0.0
    %384 = vmatpush.msra.mxu0 0.0
    %385 = vmatpush.msra.mxu0 0.0
    %386 = vmatpush.msra.mxu0 0.0
    %387 = vmatpush.msra.mxu0 0.0
    %388 = vmatpush.msra.mxu0 0.0
    %389 = vmatpush.msra.mxu0 0.0
    %390 = vmatpush.msra.mxu0 %v373
    %391 = vmatmul.f32.gmra.mxu0 %v369
    %v392 = vpop.f32.mrf.mxu0
    %v393 = vadd.f32 0.0, %v392
    %394 = vdwg.mxu0
    %v395 = vperm.slane %v393, 0
    %v396 = vmul.f32 %v268, %v395
    %v397 = vmul.f32 %v269, %v395
    %v398 = vmul.f32 %v270, %v395
    %v399 = vmul.f32 %v271, %v395
    %v400 = vperm.slane %v393, 1
    %v401 = vadd.f32 %v396, %v400
    %v402 = vadd.f32 %v397, %v400
    %v403 = vadd.f32 %v398, %v400
    %v404 = vadd.f32 %v399, %v400
    %v405 = vld [vmem:[%s7] sm:$0xff]
    %v406 = vld [vmem:[%s7 + $0x8] sm:$0xff]
    %v407 = vld [vmem:[%s7 + $0x10] sm:$0xff]
    %v408 = vld [vmem:[%s7 + $0x18] sm:$0xff]
    %v409 = vld [vmem:[%s7 + $0x20] sm:$0xff]
    %v410 = vld [vmem:[%s7 + $0x28] sm:$0xff]
    %v411 = vld [vmem:[%s7 + $0x30] sm:$0xff]
    %v412 = vld [vmem:[%s7 + $0x38] sm:$0xff]
    %v414 = vsel %vm118, %v401, 0
    %v417 = vsel %vm118, %v402, 0
    %v420 = vsel %vm118, %v403, 0
    %v423 = vsel %vm118, %v404, 0
    %425 = vmatpush.msra.mxu0 0.0
    %426 = vmatpush.msra.mxu0 0.0
    %427 = vmatpush.msra.mxu0 0.0
    %428 = vmatpush.msra.mxu0 0.0
    %429 = vmatpush.msra.mxu0 0.0
    %430 = vmatpush.msra.mxu0 0.0
    %431 = vmatpush.msra.mxu0 0.0
    %432 = vmatpush.msra.mxu0 0.0
    %433 = vmatpush.msra.mxu0 %v412
    %434 = vmatpush.msra.mxu0 %v411
    %435 = vmatpush.msra.mxu0 %v410
    %436 = vmatpush.msra.mxu0 %v409
    %437 = vmatpush.msra.mxu0 %v408
    %438 = vmatpush.msra.mxu0 %v407
    %439 = vmatpush.msra.mxu0 %v406
    %440 = vmatpush.msra.mxu0 %v405
    %441 = vmatmul.f32.gmra.mxu0 %v414
    %v442 = vpop.f32.mrf.mxu0
    %v443 = vadd.f32 0.0, %v442
    %444 = vmatmul.f32.gmra.mxu0 %v417
    %v445 = vpop.f32.mrf.mxu0
    %v446 = vadd.f32 0.0, %v445
    %447 = vmatmul.f32.gmra.mxu0 %v420
    %v448 = vpop.f32.mrf.mxu0
    %v449 = vadd.f32 0.0, %v448
    %450 = vmatmul.f32.gmra.mxu0 %v423
    %v451 = vpop.f32.mrf.mxu0
    %v452 = vadd.f32 0.0, %v451
    %453 = vdwg.mxu0
    %v454 = vsel %vm367, %v443, 0.0
    %v455 = vsel %vm367, %v446, 0.0
    %v456 = vadd.f32 %v454, %v455
    %v457 = vrot.slane %v456, 4
    %v458 = vadd.f32 %v456, %v457
    %v459 = vrot.slane %v458, 2
    %v460 = vadd.f32 %v458, %v459
    %v461 = vrot.slane %v460, 1
    %v462 = vadd.f32 %v460, %v461
    %v463 = vsel %vm367, %v449, 0.0
    %v464 = vsel %vm367, %v452, 0.0
    %v465 = vadd.f32 %v463, %v464
    %v466 = vrot.slane %v465, 4
    %v467 = vadd.f32 %v465, %v466
    %v468 = vrot.slane %v467, 2
    %v469 = vadd.f32 %v467, %v468
    %v470 = vrot.slane %v469, 1
    %v471 = vadd.f32 %v469, %v470
    %v472 = vmul.f32 %v462, 0.00390625
    %v473 = vmul.f32 %v471, 0.00390625
    %vm474 = vcmask 24576
    %475 = vst.msk [vmem:[#allocation4] sm:$0x1] %vm474, %v472
    %476 = vst.msk [vmem:[#allocation4 + $0x1] sm:$0x1] %vm474, %v473
    %v477 = vmax.f32 %v401, 0.0
    %v478 = vmax.f32 %v402, 0.0
    %v479 = vmax.f32 %v403, 0.0
    %v480 = vmax.f32 %v404, 0.0
    %v485 = vrot.slane %v477, 7
    %v486 = vrot.slane %v478, 7
    %v487 = vsel %vm302, %v485, %v486
    %v488 = vrot.slane %v479, 7
    %v489 = vrot.slane %v480, 7
    %v490 = vsel %vm302, %v488, %v489
    %v497 = vsel %vm302, 0.0, %v485
    %v498 = vsel %vm302, 0.0, %v488
    %v499 = vsel %vm302, %v486, 0.0
    %v500 = vsel %vm302, %v489, 0.0
    %v501 = vpack.c.bf16 %v487, %v497
    %v502 = vpack.c.bf16 %v490, %v498
    %v503 = vld [vmem:[%s2] sm:$0xf]
    %v504 = vld [vmem:[%s2 + $0x4] sm:$0xf]
    %v505 = vld [vmem:[%s2 + $0x8] sm:$0xf]
    %v506 = vld [vmem:[%s2 + $0xc] sm:$0xf]
    %v507 = vld [vmem:[%s2 + $0x10] sm:$0xf]
    %v508 = vld [vmem:[%s2 + $0x14] sm:$0xf]
    %v509 = vld [vmem:[%s2 + $0x18] sm:$0xf]
    %v510 = vld [vmem:[%s2 + $0x1c] sm:$0xf]
    %v515 = vrot.slane %v497, 1
    %v516 = vrot.slane %v487, 1
    %v517 = vsel %vm68, %v515, %v516
    %v518 = vrot.slane %v499, 1
    %v519 = vsel %vm68, %v516, %v518
    %v520 = vrot.slane %v498, 1
    %v521 = vrot.slane %v490, 1
    %v522 = vsel %vm68, %v520, %v521
    %v523 = vrot.slane %v500, 1
    %v524 = vsel %vm68, %v521, %v523
    %v529 = vpack.c.bf16 %v519, %v517
    %v530 = vpack.c.bf16 %v524, %v522
    %s531 = scalar_lea.vmem %s2, 32
    %v532 = vld [vmem:[%s531] sm:$0xf]
    %v533 = vld [vmem:[%s531 + $0x4] sm:$0xf]
    %v534 = vld [vmem:[%s531 + $0x8] sm:$0xf]
    %v535 = vld [vmem:[%s531 + $0xc] sm:$0xf]
    %v536 = vld [vmem:[%s531 + $0x10] sm:$0xf]
    %v537 = vld [vmem:[%s531 + $0x14] sm:$0xf]
    %v538 = vld [vmem:[%s531 + $0x18] sm:$0xf]
    %v539 = vld [vmem:[%s531 + $0x1c] sm:$0xf]
    %v548 = vunpack.c.l.b16 %v532
    %v549 = vunpack.c.l.b16 %v533
    %v550 = vunpack.c.l.b16 %v534
    %v551 = vunpack.c.l.b16 %v535
    %v552 = vunpack.c.l.b16 %v536
    %v553 = vunpack.c.l.b16 %v537
    %v554 = vunpack.c.l.b16 %v538
    %v555 = vunpack.c.l.b16 %v539
    %v556 = vpack.c.b16 %v549, %v548
    %v557 = vpack.c.b16 %v551, %v550
    %v558 = vpack.c.b16 %v553, %v552
    %v559 = vpack.c.b16 %v555, %v554
    %v565 = vsel %vm118, %v529, 0
    %v568 = vsel %vm118, %v530, 0
    %570 = vmatpush.bf16.msra.mxu0 0
    %571 = vmatpush.bf16.msra.mxu0 0
    %572 = vmatpush.bf16.msra.mxu0 0
    %573 = vmatpush.bf16.msra.mxu0 0
    %574 = vmatpush.bf16.msra.mxu0 %v559
    %575 = vmatpush.bf16.msra.mxu0 %v558
    %576 = vmatpush.bf16.msra.mxu0 %v557
    %577 = vmatpush.bf16.msra.mxu0 %v556
    %578 = vmatmul.bf16.gmra.mxu0 %v565
    %v579 = vpop.f32.mrf.mxu0
    %v580 = vadd.f32 0.0, %v579
    %v581 = vpop.f32.mrf.mxu0
    %v582 = vadd.f32 0.0, %v581
    %583 = vmatmul.bf16.gmra.mxu0 %v568
    %v584 = vpop.f32.mrf.mxu0
    %v585 = vadd.f32 0.0, %v584
    %v586 = vpop.f32.mrf.mxu0
    %v587 = vadd.f32 0.0, %v586
    %588 = vdwg.mxu0
    %v597 = vunpack.c.l.b16 %v503
    %v598 = vunpack.c.l.b16 %v504
    %v599 = vunpack.c.l.b16 %v505
    %v600 = vunpack.c.l.b16 %v506
    %v601 = vunpack.c.l.b16 %v507
    %v602 = vunpack.c.l.b16 %v508
    %v603 = vunpack.c.l.b16 %v509
    %v604 = vunpack.c.l.b16 %v510
    %v605 = vpack.c.b16 %v598, %v597
    %v606 = vpack.c.b16 %v600, %v599
    %v607 = vpack.c.b16 %v602, %v601
    %v608 = vpack.c.b16 %v604, %v603
    %v614 = vsel %vm118, %v501, 0
    %v617 = vsel %vm118, %v502, 0
    %619 = vmatpush.bf16.msra.mxu0 0
    %620 = vmatpush.bf16.msra.mxu0 0
    %621 = vmatpush.bf16.msra.mxu0 0
    %622 = vmatpush.bf16.msra.mxu0 0
    %623 = vmatpush.bf16.msra.mxu0 %v608
    %624 = vmatpush.bf16.msra.mxu0 %v607
    %625 = vmatpush.bf16.msra.mxu0 %v606
    %626 = vmatpush.bf16.msra.mxu0 %v605
    %627 = vmatmul.bf16.gmra.mxu0 %v614
    %v628 = vpop.f32.mrf.mxu0
    %v629 = vadd.f32 %v580, %v628
    %v630 = vpop.f32.mrf.mxu0
    %v631 = vadd.f32 %v582, %v630
    %632 = vmatmul.bf16.gmra.mxu0 %v617
    %v633 = vpop.f32.mrf.mxu0
    %v634 = vadd.f32 %v585, %v633
    %v635 = vpop.f32.mrf.mxu0
    %v636 = vadd.f32 %v587, %v635
    %637 = vdwg.mxu0
    %v638 = vrot.slane %v497, 2
    %v639 = vrot.slane %v487, 2
    %v640 = vsel %vm193, %v638, %v639
    %v641 = vrot.slane %v499, 2
    %v642 = vsel %vm193, %v639, %v641
    %v643 = vrot.slane %v498, 2
    %v644 = vrot.slane %v490, 2
    %v645 = vsel %vm193, %v643, %v644
    %v646 = vrot.slane %v500, 2
    %v647 = vsel %vm193, %v644, %v646
    %v652 = vpack.c.bf16 %v642, %v640
    %v653 = vpack.c.bf16 %v647, %v645
    %s654 = scalar_lea.vmem %s2, 64
    %v655 = vld [vmem:[%s654] sm:$0xf]
    %v656 = vld [vmem:[%s654 + $0x4] sm:$0xf]
    %v657 = vld [vmem:[%s654 + $0x8] sm:$0xf]
    %v658 = vld [vmem:[%s654 + $0xc] sm:$0xf]
    %v659 = vld [vmem:[%s654 + $0x10] sm:$0xf]
    %v660 = vld [vmem:[%s654 + $0x14] sm:$0xf]
    %v661 = vld [vmem:[%s654 + $0x18] sm:$0xf]
    %v662 = vld [vmem:[%s654 + $0x1c] sm:$0xf]
    %v671 = vunpack.c.l.b16 %v655
    %v672 = vunpack.c.l.b16 %v656
    %v673 = vunpack.c.l.b16 %v657
    %v674 = vunpack.c.l.b16 %v658
    %v675 = vunpack.c.l.b16 %v659
    %v676 = vunpack.c.l.b16 %v660
    %v677 = vunpack.c.l.b16 %v661
    %v678 = vunpack.c.l.b16 %v662
    %v679 = vpack.c.b16 %v672, %v671
    %v680 = vpack.c.b16 %v674, %v673
    %v681 = vpack.c.b16 %v676, %v675
    %v682 = vpack.c.b16 %v678, %v677
    %v688 = vsel %vm118, %v652, 0
    %v691 = vsel %vm118, %v653, 0
    %693 = vmatpush.bf16.msra.mxu0 0
    %694 = vmatpush.bf16.msra.mxu0 0
    %695 = vmatpush.bf16.msra.mxu0 0
    %696 = vmatpush.bf16.msra.mxu0 0
    %697 = vmatpush.bf16.msra.mxu0 %v682
    %698 = vmatpush.bf16.msra.mxu0 %v681
    %699 = vmatpush.bf16.msra.mxu0 %v680
    %700 = vmatpush.bf16.msra.mxu0 %v679
    %701 = vmatmul.bf16.gmra.mxu0 %v688
    %v702 = vpop.f32.mrf.mxu0
    %v703 = vadd.f32 0.0, %v702
    %v704 = vpop.f32.mrf.mxu0
    %v705 = vadd.f32 0.0, %v704
    %706 = vmatmul.bf16.gmra.mxu0 %v691
    %v707 = vpop.f32.mrf.mxu0
    %v708 = vadd.f32 0.0, %v707
    %v709 = vpop.f32.mrf.mxu0
    %v710 = vadd.f32 0.0, %v709
    %711 = vdwg.mxu0
    %v712 = vadd.f32 %v629, %v703
    %v713 = vadd.f32 %v631, %v705
    %v714 = vadd.f32 %v634, %v708
    %v715 = vadd.f32 %v636, %v710
    %v716 = vadd.f32 %v712, %v713
    %v717 = vadd.f32 %v716, %v714
    %v718 = vadd.f32 %v717, %v715
    %v719 = vrot.slane %v718, 4
    %v720 = vadd.f32 %v718, %v719
    %v721 = vrot.slane %v720, 2
    %v722 = vadd.f32 %v720, %v721
    %v723 = vrot.slane %v722, 1
    %v724 = vadd.f32 %v722, %v723
    %v725 = vmul.f32 %v712, %v712
    %v726 = vmul.f32 %v713, %v713
    %v727 = vmul.f32 %v714, %v714
    %v728 = vmul.f32 %v715, %v715
    %v729 = vadd.f32 %v725, %v726
    %v730 = vadd.f32 %v729, %v727
    %v731 = vadd.f32 %v730, %v728
    %v732 = vrot.slane %v731, 4
    %v733 = vadd.f32 %v731, %v732
    %v734 = vrot.slane %v733, 2
    %v735 = vadd.f32 %v733, %v734
    %v736 = vrot.slane %v735, 1
    %v737 = vadd.f32 %v735, %v736
    %v738 = vsel %vm302, %v724, %v737
    %v739 = vld [vmem:[%s5] sm:$0xff]
    %v740 = vld [vmem:[%s5 + $0x8] sm:$0xff]
    %v741 = vld [vmem:[%s5 + $0x10] sm:$0xff]
    %v742 = vld [vmem:[%s5 + $0x18] sm:$0xff]
    %v743 = vld [vmem:[%s5 + $0x20] sm:$0xff]
    %v744 = vld [vmem:[%s5 + $0x28] sm:$0xff]
    %v745 = vld [vmem:[%s5 + $0x30] sm:$0xff]
    %v746 = vld [vmem:[%s5 + $0x38] sm:$0xff]
    %v747 = vld [vmem:[%s5 + $0x40] sm:$0xff]
    %v748 = vld [vmem:[%s5 + $0x48] sm:$0xff]
    %v749 = vld [vmem:[%s5 + $0x50] sm:$0xff]
    %v750 = vld [vmem:[%s5 + $0x58] sm:$0xff]
    %v751 = vld [vmem:[%s5 + $0x60] sm:$0xff]
    %v752 = vld [vmem:[%s5 + $0x68] sm:$0xff]
    %v753 = vld [vmem:[%s5 + $0x70] sm:$0xff]
    %v754 = vld [vmem:[%s5 + $0x78] sm:$0xff]
    %755 = vmatpush.msra.mxu0 %v754
    %756 = vmatpush.msra.mxu0 %v753
    %757 = vmatpush.msra.mxu0 %v752
    %758 = vmatpush.msra.mxu0 %v751
    %759 = vmatpush.msra.mxu0 %v750
    %760 = vmatpush.msra.mxu0 %v749
    %761 = vmatpush.msra.mxu0 %v748
    %762 = vmatpush.msra.mxu0 %v747
    %763 = vmatpush.msra.mxu0 %v746
    %764 = vmatpush.msra.mxu0 %v745
    %765 = vmatpush.msra.mxu0 %v744
    %766 = vmatpush.msra.mxu0 %v743
    %767 = vmatpush.msra.mxu0 %v742
    %768 = vmatpush.msra.mxu0 %v741
    %769 = vmatpush.msra.mxu0 %v740
    %770 = vmatpush.msra.mxu0 %v739
    %771 = vmatmul.f32.gmra.mxu0 %v738
    %v772 = vpop.f32.mrf.mxu0
    %v773 = vadd.f32 0.0, %v772
    %774 = vdwg.mxu0
    %v775 = vmul.f32 %v773, 0.001953125
    %v776 = vmul.f32 %v775, %v775
    %v778 = vrot.slane %v776, 7
    %v780 = vsub.f32 %v775, %v778
    %v781 = vld [vmem:[%s10] sm:$0x1]
    %v782 = vadd.f32 %v780, 1e-05
    %v783 = vrsqrt.pop %v782
    %v784 = vmul.f32 %v783, %v782
    %v785 = vmul.f32 %v784, %v783
    %v786 = vmul.f32 0.5, %v785
    %v787 = vsub.f32 1.5, %v786
    %v788 = vmul.f32 %v783, %v787
    %vm789 = vweird.f32 %v782
    %vm790 = vweird.f32 %v783
    %vm791 = vmor %vm789, %vm790
    %v792 = vsel %vm791, %v783, %v788
    %794 = vst [vmem:[#allocation1] sm:$0xff] %v792
    %s795 = scalar_lea.vmem [#allocation1], 1
    %v796 = vld [vmem:[%s795] ss:$9 sm:$0xff]
    %v798 = vmul.f32 %v781, %v796
    %v799 = vld [vmem:[%s11] sm:$0x1]
    %v800 = vmul.f32 %v775, %v798
    %v801 = vsub.f32 %v799, %v800
    %v803 = vperm.slane %v801, 0
    %v805 = vsel %vm302, %v798, %v803
    %v806 = vld [vmem:[%s6] sm:$0xff]
    %vm807 = vcmask 64512
    %v809 = vsel %vm807, %v805, 0
    %811 = vmatpush.msra.mxu0 0.0
    %812 = vmatpush.msra.mxu0 0.0
    %813 = vmatpush.msra.mxu0 0.0
    %814 = vmatpush.msra.mxu0 0.0
    %815 = vmatpush.msra.mxu0 0.0
    %816 = vmatpush.msra.mxu0 0.0
    %817 = vmatpush.msra.mxu0 0.0
    %818 = vmatpush.msra.mxu0 0.0
    %819 = vmatpush.msra.mxu0 0.0
    %820 = vmatpush.msra.mxu0 0.0
    %821 = vmatpush.msra.mxu0 0.0
    %822 = vmatpush.msra.mxu0 0.0
    %823 = vmatpush.msra.mxu0 0.0
    %824 = vmatpush.msra.mxu0 0.0
    %825 = vmatpush.msra.mxu0 0.0
    %826 = vmatpush.msra.mxu0 %v806
    %827 = vmatmul.f32.gmra.mxu0 %v809
    %v828 = vpop.f32.mrf.mxu0
    %v829 = vadd.f32 0.0, %v828
    %830 = vdwg.mxu0
    %v831 = vperm.slane %v829, 0
    %v832 = vmul.f32 %v712, %v831
    %v833 = vmul.f32 %v713, %v831
    %v834 = vmul.f32 %v714, %v831
    %v835 = vmul.f32 %v715, %v831
    %v836 = vperm.slane %v829, 1
    %v837 = vadd.f32 %v832, %v836
    %v838 = vadd.f32 %v833, %v836
    %v839 = vadd.f32 %v834, %v836
    %v840 = vadd.f32 %v835, %v836
    %v841 = vmax.f32 %v837, 0.0
    %v842 = vmax.f32 %v838, 0.0
    %v843 = vmax.f32 %v839, 0.0
    %v844 = vmax.f32 %v840, 0.0
    %845 = vst [vmem:[#allocation2] sm:$0xff] %v841
    %846 = vst [vmem:[#allocation2 + $0x8] sm:$0xff] %v842
    %847 = vst [vmem:[#allocation2 + $0x10] sm:$0xff] %v843
    %848 = vst [vmem:[#allocation2 + $0x18] sm:$0xff] %v844
    // Predicated region
    $region50: #{tpu_custom_call.1} parent=1 // pred_check
      _
    $region51: #{tpu_custom_call.1} parent=1 // pred_check_branch
      %850 = sbr.rel (0) target = $region53
    $region52: #{tpu_custom_call.1} parent=1 // pred_region
      %852 = vsyncadd [#allocation3], 0
      %s853 = sshll.u32 [#allocation2], 4
      %s854 = int_to_ptr.vmem [resolvable:$true] %s853
      %s855 = sshll.u32 %s12, 4
      %s856 = int_to_ptr.hbm [resolvable:$true] %s855
      %861 = dma.vmem_to_hbm [thread:$0]  %s854, 512, %s856, [#allocation3], 128, 128, 8
    $region53: #{tpu_custom_call.1} parent=1 // pred_fallthru
      _
    // Predicated region
    $region54: #{tpu_custom_call.1} parent=1 // pred_check
      _
    $region55: #{tpu_custom_call.1} parent=1 // pred_check_branch
      %863 = sbr.rel (0) target = $region57
    $region56: #{tpu_custom_call.1} parent=1 // pred_region
      %865 = vsyncadd [#allocation5], 0
      %s866 = sshll.u32 [#allocation4], 4
      %s867 = int_to_ptr.vmem [resolvable:$true] %s866
      %s868 = sshll.u32 %s13, 4
      %s869 = int_to_ptr.hbm [resolvable:$true] %s868
      %874 = dma.vmem_to_hbm [thread:$0]  %s867, 32, %s869, [#allocation5], 16, 16, 1
    $region57: #{tpu_custom_call.1} parent=1 // pred_fallthru
      _
    // Predicated region
    $region58: #{tpu_custom_call.1} parent=1 // pred_check
      _
    $region59: #{tpu_custom_call.1} parent=1 // pred_check_branch
      %876 = sbr.rel (0) target = $region61
    $region60: #{tpu_custom_call.1} parent=1 // pred_region
      %878 = dma.done [#allocation3], 512
    $region61: #{tpu_custom_call.1} parent=1 // pred_fallthru
      _
    // Predicated region
    $region62: #{tpu_custom_call.1} parent=1 // pred_check
      _
    $region63: #{tpu_custom_call.1} parent=1 // pred_check_branch
      %880 = sbr.rel (0) target = $region65
    $region64: #{tpu_custom_call.1} parent=1 // pred_region
      %882 = dma.done [#allocation5], 32
    $region65: #{tpu_custom_call.1} parent=1 // pred_fallthru
      _
    %883 = vsyncpa [#allocation3], 1
    %884 = vsyncpa [#allocation5], 1

</llo_original>
